<compile_context>
chip_gen: v7x
topology: tpu7x:2x2x1
jax: 0.10.0
libtpu: 0.0.40
codegen_flags: <defaults>
</compile_context>

<pallas_src>
import functools
import math

import jax
import jax.numpy as jnp
from jax.experimental import pallas as pl
from jax.experimental.pallas import tpu as pltpu

_LN2 = math.log(2.0)


def _round_up(x, m):
    return ((x + m - 1) // m) * m


def _bce_with_logits(x, t):
    # Numerically stable elementwise BCEWithLogitsLoss(reduction='none'):
    #   max(x, 0) - x*t + log(1 + exp(-|x|))
    return jnp.maximum(x, 0.0) - x * t + jnp.log1p(jnp.exp(-jnp.abs(x)))


def _auto_compute_dtype():
    """bf16 on chips whose VPU/EUP support it (v6e, v7x); f32 otherwise (v5e/v4)."""
    try:
        kind = jax.devices()[0].device_kind.lower()
    except Exception:
        return jnp.float32
    if any(tag in kind for tag in ("v6", "v7", "7x")):
        return jnp.bfloat16
    return jnp.float32


def _ordmet_kernel(col_ref, row_ref, out_ref, sum_acc, cnt_acc, *,
                   pos_label, n_actual, tm, tk, row_padded, col_padded,
                   compute_dtype):
    i = pl.program_id(0)
    k = pl.program_id(1)
    nk = pl.num_programs(1)

    # ---- init running accumulators at the start of each row tile's k loop ----
    @pl.when(k == 0)
    def _():
        sum_acc[...] = jnp.zeros_like(sum_acc)
        if pos_label == 'none':
            cnt_acc[...] = jnp.zeros_like(cnt_acc)

    col = col_ref[...]                                  # (TM, 2) f32 [score|label]
    row = row_ref[...]                                  # (2, TK) f32 [score;label]
    s_col = col[:, 0:1].astype(compute_dtype)           # (TM, 1)
    l_col = col[:, 1:2]                                 # (TM, 1) f32 labels
    s_row = row[0:1, :].astype(compute_dtype)           # (1, TK) lane-dense
    l_row = row[1:2, :]                                 # (1, TK) f32 labels

    if col_padded:                                      # static Python bool
        col_idx = k * tk + jax.lax.broadcasted_iota(jnp.int32, (1, tk), 1)
        col_valid = col_idx < n_actual                  # (1, TK)

    diff = s_col - s_row                                # (TM, TK) pairwise diff
    upper = l_col > l_row                               # labels[i] > labels[j]
    upper_t = upper.astype(compute_dtype)

    if pos_label == 'none':
        lower = l_col < l_row
        neg = jnp.logical_or(upper, lower)
        if col_padded:
            neg = jnp.logical_and(neg, col_valid)
        neg_f = neg.astype(jnp.float32)
        bce = _bce_with_logits(diff, upper_t).astype(jnp.float32)
        sum_acc[...] += jnp.sum(bce * neg_f, axis=1, keepdims=True)
        cnt_acc[...] += jnp.sum(neg_f, axis=1, keepdims=True)
    else:
        if pos_label == 'same':
            eq_t = (l_col == l_row).astype(compute_dtype)
            target = upper_t + 0.5 * eq_t               # upper / eq are disjoint
        elif pos_label == 'lower':
            target = upper_t
        elif pos_label == 'upper':
            target = jnp.logical_not(l_col < l_row).astype(compute_dtype)
        else:
            raise ValueError('`pos_label` must be one of {none, same, lower, upper}')
        bce = _bce_with_logits(diff, target).astype(jnp.float32)
        if col_padded:
            bce = jnp.where(col_valid, bce, 0.0)
        sum_acc[...] += jnp.sum(bce, axis=1, keepdims=True)

    # ---- finalize: per-row normalization + tile reduction, written once -------
    @pl.when(k == nk - 1)
    def _():
        if pos_label == 'none':
            per_row = sum_acc[...] * pl.reciprocal(cnt_acc[...], approx=False)
        else:
            # Diagonal: diff == 0 -> BCE == log(2) for any target in {0, 0.5, 1};
            # logits_mask.sum(1) == N-1, both are compile-time constants.
            inv_nm1 = (1.0 / (n_actual - 1)) if n_actual > 1 else float('nan')
            per_row = (sum_acc[...] - _LN2) * inv_nm1
        if row_padded:
            row_idx = i * tm + jax.lax.broadcasted_iota(jnp.int32, (tm, 1), 0)
            per_row = jnp.where(row_idx < n_actual, per_row, 0.0)
        out_ref[...] = jnp.sum(per_row, axis=0, keepdims=True).reshape(1, 1, 1)


def ordinal_metric_loss(scores, labels, pos_label='none', *,
                        block_rows=128, block_cols=2048,
                        compute_dtype=None, core_parallel=False,
                        vmem_limit_bytes=32 * 1024 * 1024):
    """Pallas equivalent of OrdinalMetricLoss(pos_label).forward(scores, labels).

    compute_dtype=None auto-selects bf16 on v6e/v7x (f32 accumulation kept), f32
    elsewhere.  block_rows/block_cols bound the per-step (TM, TK) slab.
    """
    scores = jnp.asarray(scores, jnp.float32).reshape(-1)
    labels = jnp.asarray(labels, jnp.float32).reshape(-1)
    n = int(scores.shape[0])
    if int(labels.shape[0]) != n:
        raise ValueError('Num of labels does not match num of features')
    if pos_label not in ('none', 'same', 'lower', 'upper'):
        raise ValueError('`pos_label` must be one of {none, same, lower, upper}')
    if compute_dtype is None:
        compute_dtype = _auto_compute_dtype()

    # Row tile (sublane axis): multiple of 8.  Column tile (lane axis): multiple
    # of 128.  Row/column views are padded independently to their tile sizes.
    tm = min(_round_up(block_rows, 8), _round_up(n, 8))
    tk = min(_round_up(block_cols, 128), _round_up(n, 128))
    p_rows = _round_up(n, tm)
    p_cols = _round_up(n, tk)
    num_row_tiles = p_rows // tm
    num_col_tiles = p_cols // tk

    s_r = jnp.pad(scores, (0, p_rows - n))
    l_r = jnp.pad(labels, (0, p_rows - n))
    s_c = jnp.pad(scores, (0, p_cols - n))
    l_c = jnp.pad(labels, (0, p_cols - n))
    col_arr = jnp.stack([s_r, l_r], axis=1)      # (P_rows, 2): one DMA per row tile
    row_arr = jnp.stack([s_c, l_c], axis=0)      # (2, P_cols): streamed per k tile

    kernel = functools.partial(
        _ordmet_kernel, pos_label=pos_label, n_actual=n, tm=tm, tk=tk,
        row_padded=(p_rows != n), col_padded=(p_cols != n),
        compute_dtype=compute_dtype)

    cost = pl.CostEstimate(
        flops=8 * n * n,             # sub/cmp/mul/add per pairwise element
        transcendentals=2 * n * n,   # exp + log1p per pairwise element (EUP-bound)
        bytes_accessed=4 * (2 * p_rows                      # column operand (once/tile row)
                            + num_row_tiles * 2 * p_cols    # row operand re-read per row tile
                            + num_row_tiles))               # partial-sum writeback

    if core_parallel:
        # Explicit TC sharding of the row axis (v7x megacore).
        dims = (pltpu.CORE_PARALLEL, pltpu.ARBITRARY)
    else:
        dims = ("parallel", "arbitrary")

    partial_sums = pl.pallas_call(
        kernel,
        out_shape=jax.ShapeDtypeStruct((num_row_tiles, 1, 1), jnp.float32),
        grid_spec=pltpu.PrefetchScalarGridSpec(
            num_scalar_prefetch=0,
            grid=(num_row_tiles, num_col_tiles),
            in_specs=[
                pl.BlockSpec((tm, 2), lambda i, k: (i, 0)),   # packed column tile
                pl.BlockSpec((2, tk), lambda i, k: (0, k)),   # packed row tile (lane-dense)
            ],
            out_specs=pl.BlockSpec((1, 1, 1), lambda i, k: (i, 0, 0)),
            scratch_shapes=[
                pltpu.VMEM((tm, 1), jnp.float32),   # running row-sum of BCE
                pltpu.VMEM((tm, 1), jnp.float32),   # running negative-pair count ('none')
            ],
        ),
        compiler_params=pltpu.CompilerParams(
            dimension_semantics=dims,
            vmem_limit_bytes=vmem_limit_bytes,
        ),
        cost_estimate=cost,
    )(col_arr, row_arr)

    return {'loss': jnp.sum(partial_sums) / n}


def _reference(scores, labels, pos_label='none'):
    """Pure-JAX reference mirroring the PyTorch module (for correctness check)."""
    scores = jnp.asarray(scores, jnp.float32).reshape(-1, 1)
    labels = jnp.asarray(labels, jnp.float32).reshape(-1, 1)
    n = scores.shape[0]
    upper = labels > labels.T
    lower = labels < labels.T
    logits_mask = 1.0 - jnp.eye(n, dtype=jnp.float32)
    diff = scores - scores.T
    if pos_label == 'none':
        neg = jnp.logical_or(upper, lower).astype(jnp.float32)
        loss = (_bce_with_logits(diff, upper.astype(jnp.float32)) * neg).sum(1) / neg.sum(1)
    elif pos_label == 'same':
        eq = (labels == labels.T).astype(jnp.float32)
        label_mat = jnp.where(upper, 1.0, eq * 0.5)
        loss = (_bce_with_logits(diff, label_mat) * logits_mask).sum(1) / logits_mask.sum(1)
    elif pos_label == 'lower':
        loss = (_bce_with_logits(diff, upper.astype(jnp.float32)) * logits_mask).sum(1) / logits_mask.sum(1)
    elif pos_label == 'upper':
        loss = (_bce_with_logits(diff, 1.0 - lower.astype(jnp.float32)) * logits_mask).sum(1) / logits_mask.sum(1)
    else:
        raise ValueError
    return loss.mean()


if __name__ == "__main__":
    key = jax.random.PRNGKey(0)
    auto_dtype = _auto_compute_dtype()
    auto_tol = 5e-2 if auto_dtype == jnp.bfloat16 else 1e-4

    ok = True
    # Case 0: single tile on both axes (N fits one block).
    # Case 1: multi row tiles + row/column padding (N=12, TM=8 -> 2 row tiles).
    # Case 2: multi row AND column tiles (N=300, TM=TK=128 -> 3x3 grid), exercising
    #         the flash-style running accumulator and both padding masks.
    cases = [(8, 128, 2048), (12, 8, 128), (300, 128, 128)]
    for case_i, (n, brows, bcols) in enumerate(cases):
        k = jax.random.fold_in(key, case_i)
        scores = jax.random.normal(k, (n, 1), dtype=jnp.float32)
        # Deterministic ordinal labels in {0,1,2,3}; guarantees every row has at
        # least one differing label (no 0/0 NaN in the 'none' mode).
        labels = (jnp.arange(n, dtype=jnp.int32) % 4).astype(jnp.float32).reshape(n, 1)

        for mode in ('none', 'same', 'lower', 'upper'):
            ref = _reference(scores, labels, pos_label=mode)

            # f32 elementwise path (tight tolerance).
            out = ordinal_metric_loss(scores, labels, pos_label=mode,
                                      block_rows=brows, block_cols=bcols,
                                      compute_dtype=jnp.float32)
            loss = jax.block_until_ready(out['loss'])
            if not jnp.allclose(loss, ref, atol=1e-4, rtol=1e-4):
                ok = False
                print(f"f32 mismatch n={n} mode={mode}: kernel={float(loss)} ref={float(ref)}")

            # Auto-selected dtype (bf16 on v6e/v7x), looser tolerance.
            out2 = ordinal_metric_loss(scores, labels, pos_label=mode,
                                       block_rows=brows, block_cols=bcols)
            loss2 = jax.block_until_ready(out2['loss'])
            if not jnp.allclose(loss2, ref, atol=auto_tol, rtol=auto_tol):
                ok = False
                print(f"auto-dtype mismatch n={n} mode={mode}: "
                      f"kernel={float(loss2)} ref={float(ref)}")

    if ok:
        print("KERNEL_OK")
</pallas_src>

<mosaic_0001>
module attributes {stable_mosaic.version = 11 : i64} {
  func.func @_ordmet_kernel(%arg0: i32, %arg1: i32, %arg2: memref<8x2xf32, #tpu.memory_space<vmem>>, %arg3: memref<2x128xf32, #tpu.memory_space<vmem>>, %arg4: memref<1x1x1xf32, #tpu.memory_space<vmem>>, %arg5: memref<8x1xf32, #tpu.memory_space<vmem>>, %arg6: memref<8x1xf32, #tpu.memory_space<vmem>>) attributes {dimension_semantics = [#tpu.dimension_semantics<parallel>, #tpu.dimension_semantics<arbitrary>], iteration_bounds = array<i64: 1, 1>, scalar_prefetch = 0 : i64, scratch_operands = 2 : i64, tpu.core_type = #tpu.core_type<tc>, window_params = [{transform_indices = @transform_0, window_bounds = array<i64: 8, 2>}, {transform_indices = @transform_1, window_bounds = array<i64: 2, 128>}, {transform_indices = @transform_2, window_bounds = array<i64: 1, 1, 1>}]} {
    %c0_i32 = arith.constant 0 : i32
    %0 = arith.cmpi eq, %arg1, %c0_i32 : i32
    %1 = arith.extui %0 : i1 to i32
    %c0_i32_0 = arith.constant 0 : i32
    %2 = arith.cmpi ne, %1, %c0_i32_0 : i32
    scf.if %2 {
      %cst_17 = arith.constant 0.000000e+00 : f32
      %55 = vector.broadcast %cst_17 : f32 to vector<8x1xf32>
      %c0_18 = arith.constant 0 : index
      %c0_19 = arith.constant 0 : index
      %56 = vector.load %arg5[%c0_18, %c0_19] : memref<8x1xf32, #tpu.memory_space<vmem>>, vector<8x1xf32>
      tpu.vector_store %arg5[%c0_18, %c0_19], %55 {strides = array<i32>} : memref<8x1xf32, #tpu.memory_space<vmem>>, vector<8x1xf32>,
      %cst_20 = arith.constant 0.000000e+00 : f32
      %57 = vector.broadcast %cst_20 : f32 to vector<8x1xf32>
      %c0_21 = arith.constant 0 : index
      %c0_22 = arith.constant 0 : index
      %58 = vector.load %arg6[%c0_21, %c0_22] : memref<8x1xf32, #tpu.memory_space<vmem>>, vector<8x1xf32>
      tpu.vector_store %arg6[%c0_21, %c0_22], %57 {strides = array<i32>} : memref<8x1xf32, #tpu.memory_space<vmem>>, vector<8x1xf32>,
    } else {
    }
    %c0 = arith.constant 0 : index
    %c0_1 = arith.constant 0 : index
    %3 = vector.load %arg2[%c0, %c0_1] : memref<8x2xf32, #tpu.memory_space<vmem>>, vector<8x2xf32>
    %c0_2 = arith.constant 0 : index
    %c0_3 = arith.constant 0 : index
    %4 = vector.load %arg3[%c0_2, %c0_3] : memref<2x128xf32, #tpu.memory_space<vmem>>, vector<2x128xf32>
    %5 = vector.extract_strided_slice %3 {offsets = [0, 0], sizes = [8, 1], strides = [1, 1]} : vector<8x2xf32> to vector<8x1xf32>
    %6 = vector.extract_strided_slice %3 {offsets = [0, 1], sizes = [8, 1], strides = [1, 1]} : vector<8x2xf32> to vector<8x1xf32>
    %7 = vector.extract_strided_slice %4 {offsets = [0, 0], sizes = [1, 128], strides = [1, 1]} : vector<2x128xf32> to vector<1x128xf32>
    %8 = vector.extract_strided_slice %4 {offsets = [1, 0], sizes = [1, 128], strides = [1, 1]} : vector<2x128xf32> to vector<1x128xf32>
    %c128_i32 = arith.constant 128 : i32
    %9 = arith.muli %arg1, %c128_i32 : i32
    %10 = tpu.iota {dimensions = array<i32: 1>} : vector<1x128xi32>
    %11 = vector.broadcast %9 : i32 to vector<1x128xi32>
    %12 = arith.addi %11, %10 : vector<1x128xi32>
    %c8_i32 = arith.constant 8 : i32
    %13 = vector.broadcast %c8_i32 : i32 to vector<1x128xi32>
    %14 = arith.cmpi slt, %12, %13 : vector<1x128xi32>
    %15 = vector.broadcast %5 : vector<8x1xf32> to vector<8x128xf32>
    %16 = vector.broadcast %7 : vector<1x128xf32> to vector<8x128xf32>
    %17 = arith.subf %15, %16 : vector<8x128xf32>
    %18 = vector.broadcast %6 : vector<8x1xf32> to vector<8x128xf32>
    %19 = vector.broadcast %8 : vector<1x128xf32> to vector<8x128xf32>
    %20 = arith.cmpf ogt, %18, %19 : vector<8x128xf32>
    %21 = arith.extui %20 : vector<8x128xi1> to vector<8x128xi32>
    %22 = arith.sitofp %21 : vector<8x128xi32> to vector<8x128xf32>
    %23 = vector.broadcast %6 : vector<8x1xf32> to vector<8x128xf32>
    %24 = vector.broadcast %8 : vector<1x128xf32> to vector<8x128xf32>
    %25 = arith.cmpf olt, %23, %24 : vector<8x128xf32>
    %26 = arith.ori %20, %25 : vector<8x128xi1>
    %27 = vector.broadcast %14 : vector<1x128xi1> to vector<8x128xi1>
    %28 = arith.andi %26, %27 : vector<8x128xi1>
    %29 = arith.extui %28 : vector<8x128xi1> to vector<8x128xi32>
    %30 = arith.sitofp %29 : vector<8x128xi32> to vector<8x128xf32>
    %cst = arith.constant 0.000000e+00 : f32
    %31 = vector.broadcast %cst : f32 to vector<8x128xf32>
    %32 = arith.maximumf %17, %31 : vector<8x128xf32>
    %33 = arith.mulf %17, %22 : vector<8x128xf32>
    %34 = arith.subf %32, %33 : vector<8x128xf32>
    %35 = math.absf %17 : vector<8x128xf32>
    %cst_4 = arith.constant 0.000000e+00 : f32
    %36 = vector.broadcast %cst_4 : f32 to vector<8x128xf32>
    %37 = arith.subf %36, %35 : vector<8x128xf32>
    %38 = math.exp %37 : vector<8x128xf32>
    %39 = math.log1p %38 : vector<8x128xf32>
    %40 = arith.addf %34, %39 : vector<8x128xf32>
    %c0_5 = arith.constant 0 : index
    %c0_6 = arith.constant 0 : index
    %41 = vector.load %arg5[%c0_5, %c0_6] : memref<8x1xf32, #tpu.memory_space<vmem>>, vector<8x1xf32>
    %42 = arith.mulf %40, %30 : vector<8x128xf32>
    %cst_7 = arith.constant dense<0.000000e+00> : vector<8xf32>
    %43 = vector.multi_reduction <add>, %42, %cst_7 [1] : vector<8x128xf32> to vector<8xf32>
    %44 = vector.shape_cast %43 : vector<8xf32> to vector<8x1xf32>
    %45 = arith.addf %41, %44 : vector<8x1xf32>
    %c0_8 = arith.constant 0 : index
    %c0_9 = arith.constant 0 : index
    %46 = vector.load %arg5[%c0_8, %c0_9] : memref<8x1xf32, #tpu.memory_space<vmem>>, vector<8x1xf32>
    tpu.vector_store %arg5[%c0_8, %c0_9], %45 {strides = array<i32>} : memref<8x1xf32, #tpu.memory_space<vmem>>, vector<8x1xf32>,
    %c0_10 = arith.constant 0 : index
    %c0_11 = arith.constant 0 : index
    %47 = vector.load %arg6[%c0_10, %c0_11] : memref<8x1xf32, #tpu.memory_space<vmem>>, vector<8x1xf32>
    %cst_12 = arith.constant dense<0.000000e+00> : vector<8xf32>
    %48 = vector.multi_reduction <add>, %30, %cst_12 [1] : vector<8x128xf32> to vector<8xf32>
    %49 = vector.shape_cast %48 : vector<8xf32> to vector<8x1xf32>
    %50 = arith.addf %47, %49 : vector<8x1xf32>
    %c0_13 = arith.constant 0 : index
    %c0_14 = arith.constant 0 : index
    %51 = vector.load %arg6[%c0_13, %c0_14] : memref<8x1xf32, #tpu.memory_space<vmem>>, vector<8x1xf32>
    tpu.vector_store %arg6[%c0_13, %c0_14], %50 {strides = array<i32>} : memref<8x1xf32, #tpu.memory_space<vmem>>, vector<8x1xf32>,
    %c0_i32_15 = arith.constant 0 : i32
    %52 = arith.cmpi eq, %arg1, %c0_i32_15 : i32
    %53 = arith.extui %52 : i1 to i32
    %c0_i32_16 = arith.constant 0 : i32
    %54 = arith.cmpi ne, %53, %c0_i32_16 : i32
    scf.if %54 {
      %c0_17 = arith.constant 0 : index
      %c0_18 = arith.constant 0 : index
      %55 = vector.load %arg5[%c0_17, %c0_18] : memref<8x1xf32, #tpu.memory_space<vmem>>, vector<8x1xf32>
      %c0_19 = arith.constant 0 : index
      %c0_20 = arith.constant 0 : index
      %56 = vector.load %arg6[%c0_19, %c0_20] : memref<8x1xf32, #tpu.memory_space<vmem>>, vector<8x1xf32>
      %57 = tpu.reciprocal %56 : vector<8x1xf32> -> vector<8x1xf32>
      %58 = arith.mulf %55, %57 : vector<8x1xf32>
      %cst_21 = arith.constant dense<0.000000e+00> : vector<1xf32>
      %59 = vector.multi_reduction <add>, %58, %cst_21 [0] : vector<8x1xf32> to vector<1xf32>
      %60 = vector.shape_cast %59 : vector<1xf32> to vector<1x1xf32>
      %61 = vector.shape_cast %60 : vector<1x1xf32> to vector<1x1x1xf32>
      %c0_22 = arith.constant 0 : index
      %c0_23 = arith.constant 0 : index
      %c0_24 = arith.constant 0 : index
      %62 = vector.load %arg4[%c0_22, %c0_23, %c0_24] : memref<1x1x1xf32, #tpu.memory_space<vmem>>, vector<1x1x1xf32>
      tpu.vector_store %arg4[%c0_22, %c0_23, %c0_24], %61 {strides = array<i32>} : memref<1x1x1xf32, #tpu.memory_space<vmem>>, vector<1x1x1xf32>,
    } else {
    }
    return
  }
  func.func @transform_0(%arg0: i32, %arg1: i32) -> (i32, i32) {
    %c0_i32 = arith.constant 0 : i32
    %c0_i32_0 = arith.constant 0 : i32
    return %arg0, %c0_i32 : i32, i32
  }
  func.func @transform_1(%arg0: i32, %arg1: i32) -> (i32, i32) {
    %c0_i32 = arith.constant 0 : i32
    %c0_i32_0 = arith.constant 0 : i32
    return %c0_i32, %arg1 : i32, i32
  }
  func.func @transform_2(%arg0: i32, %arg1: i32) -> (i32, i32, i32) {
    %c0_i32 = arith.constant 0 : i32
    %c0_i32_0 = arith.constant 0 : i32
    %c0_i32_1 = arith.constant 0 : i32
    return %arg0, %c0_i32, %c0_i32_0 : i32, i32, i32
  }
}

</mosaic_0001>

<llo_original>
// kernel: tpu_custom_call.1
$region0: #{tpu_custom_call.1}
  #allocation0 [shape = 'u32[]', space=smem, size = 0x4, offset = 0x4, fixed_abs, tag = 'smem constant byte address 0x4 - core index']
  #allocation1 [shape = 'u32[144,128]{1,0:T(1,128)}', space=vmem, size = 0x12000, scoped, tag = 'internal scratch']
  #allocation2 [shape = 'f32[8,1]{1,0:T(8,128)}', space=vmem, size = 0x1000, scoped, tag = 'scratch operand']
  #allocation3 [shape = 'f32[8,1]{1,0:T(8,128)}', space=vmem, size = 0x1000, scoped, tag = 'scratch operand']
  %s0 = inlined_call_operand.vmem [shape: f32[8,2], index: 0, kind: input, shape index: {}]
  %s1 = inlined_call_operand.vmem [shape: f32[2,128], index: 1, kind: input, shape index: {}]
  %s2 = inlined_call_operand.hbm [shape: f32[1,1,1], index: 2, kind: output, shape index: {}]
  %s3 = sld [smem:[#allocation0]]
  $region26: #{tpu_custom_call.1} parent=0
    _
  %s5 = ssub.s32 1, %s3
  %s6 = scalar_select 0, %s5, %s3
  $region1: #{tpu_custom_call.1} parent=0
    #allocation4 [shape = 'u8[512]{0}', space=vmem, size = 0x400, scoped, tag = 'output window, operand 0, single buffered']
    #allocation5 [shape = 's32[1]{0}', space=sflag, size = 0x4, scoped, tag = 'scoped memory for tpu_custom_call.1']
    %7 = vsyncpa [#allocation5], 0
    // Predicated region
    $region2: #{tpu_custom_call.1} parent=1 // pred_check
      _
    $region3: #{tpu_custom_call.1} parent=1 // pred_check_branch
      %9 = sbr.rel (0) target = $region5
    $region4: #{tpu_custom_call.1} parent=1 // pred_region
      _
    $region5: #{tpu_custom_call.1} parent=1 // pred_fallthru
      _
    // Predicated region
    $region6: #{tpu_custom_call.1} parent=1 // pred_check
      _
    $region7: #{tpu_custom_call.1} parent=1 // pred_check_branch
      %11 = sbr.rel (0) target = $region9
    $region8: #{tpu_custom_call.1} parent=1 // pred_region
      _
    $region9: #{tpu_custom_call.1} parent=1 // pred_fallthru
      _
    %p12 = scmp.eq.s32.totalorder 0, 0
    // Predicated region
    $region10: #{tpu_custom_call.1} parent=1 // pred_check
      %p13 = pneg %p12
    $region11: #{tpu_custom_call.1} parent=1 // pred_check_branch
      %15 = sbr.rel (%p13) target = $region13
    $region12: #{tpu_custom_call.1} parent=1 // pred_region
      %vm16 = vcmask 7168
      %17 = vst.msk [vmem:[#allocation2] sm:$0xff] %vm16, 0.0
      %18 = vst.msk [vmem:[#allocation3] sm:$0xff] %vm16, 0.0
    $region13: #{tpu_custom_call.1} parent=1 // pred_fallthru
      _
    %v19 = vld [vmem:[%s0] sm:$0xff]
    %v20 = vld [vmem:[%s1] sm:$0x3]
    %s21 = smul.u32 0, 128
    %v22 = vlaneseq
    %v23 = vand.u32 %v22, 127
    %v24 = vstv %s21
    %v25 = vadd.s32 %v24, %v23
    %vm26 = vcmp.lt.s32.totalorder %v25, 8
    %28 = vset.pattern.permute.xlu0 0
    %29 = vperm.xlu0 %28, %v19
    %v30 = vpop.permute.xlu0 %29
    %v32 = vlaneseq
    %v33 = vshrl.u32 %v32, 7
    %v34 = vsub.s32 0, %v33
    %v35 = vrot.slane %v20, %v34
    %v36 = vsub.f32 %v30, %v35
    %37 = vset.pattern.permute.xlu0 1
    %38 = vperm.xlu0 %37, %v19
    %v39 = vpop.permute.xlu0 %38
    %v41 = vlaneseq
    %v42 = vshrl.u32 %v41, 7
    %v43 = vsub.s32 1, %v42
    %v44 = vrot.slane %v20, %v43
    %vm45 = vcmp.gt.f32.partialorder %v39, %v44
    %v46 = vsel %vm45, 1, 0
    %v47 = vcvt.s32.f32 %v46
    %vm48 = vcmp.lt.f32.partialorder %v39, %v44
    %vm49 = vmor %vm45, %vm48
    %v50 = vsel %vm26, 1, 0
    %vm51 = vcmp.eq.s32.totalorder %v50, 1
    %vm52 = vmand %vm49, %vm51
    %v53 = vsel %vm52, 1, 0
    %v54 = vcvt.s32.f32 %v53
    %v55 = vmax.f32 %v36, 0.0
    %v56 = vmul.f32 %v36, %v47
    %v57 = vsub.f32 %v55, %v56
    %v58 = vand.u32 2147483647, %v36
    %v59 = vsub.f32 0.0, %v58
    %v60 = vmul.f32 %v59, 1.442695
    %v61 = vpow.pop %v60
    %v62 = vadd.f32 %v61, 1.0
    %v63 = vlog2.pop %v62
    %v64 = vmul.f32 %v63, 0.6931472
    %v65 = vmul.f32 -0.5, %v61
    %v66 = vadd.f32 %v65, 1.0
    %v67 = vmul.f32 %v66, %v61
    %v68 = vand.u32 2147483647, %v61
    %vm69 = vcmp.lt.f32.partialorder %v68, 0.0004427343
    %v70 = vsel %vm69, %v67, %v64
    %v71 = vadd.f32 %v57, %v70
    %v72 = vld [vmem:[#allocation2] sm:$0xff]
    %v73 = vmul.f32 %v71, %v54
    %74 = vadd.xlane.f32.xlu0 %v73
    %v75 = vpop.xlane.xlu0 %74
    %v76 = vadd.f32 %v72, %v75
    %vm77 = vcmask 7168
    %78 = vst.msk [vmem:[#allocation2] sm:$0xff] %vm77, %v76
    %v79 = vld [vmem:[#allocation3] sm:$0xff]
    %80 = vadd.xlane.f32.xlu0 %v54
    %v81 = vpop.xlane.xlu0 %80
    %v82 = vadd.f32 %v79, %v81
    %83 = vst.msk [vmem:[#allocation3] sm:$0xff] %vm77, %v82
    // Predicated region
    $region14: #{tpu_custom_call.1} parent=1 // pred_check
      %p84 = pneg %p12
    $region15: #{tpu_custom_call.1} parent=1 // pred_check_branch
      %86 = sbr.rel (%p84) target = $region17
    $region16: #{tpu_custom_call.1} parent=1 // pred_region
      %v87 = vld [vmem:[#allocation2] sm:$0xff]
      %v88 = vld [vmem:[#allocation3] sm:$0xff]
      %v89 = vrcp.pop %v88
      %v90 = vmul.f32 %v87, %v89
      %v91 = vsel %vm77, %v90, 0.0
      %v92 = vrot.slane %v91, 4
      %v93 = vadd.f32 %v91, %v92
      %v94 = vrot.slane %v93, 2
      %v95 = vadd.f32 %v93, %v94
      %v96 = vrot.slane %v95, 1
      %v97 = vadd.f32 %v95, %v96
      %vm98 = vcmask 0
      %99 = vst.msk [vmem:[#allocation4] sm:$0x1] %vm98, %v97
    $region17: #{tpu_custom_call.1} parent=1 // pred_fallthru
      _
    // Predicated region
    $region18: #{tpu_custom_call.1} parent=1 // pred_check
      _
    $region19: #{tpu_custom_call.1} parent=1 // pred_check_branch
      %101 = sbr.rel (0) target = $region21
    $region20: #{tpu_custom_call.1} parent=1 // pred_region
      %s103 = ssub.s32 16, 16
      %104 = vsyncadd [#allocation5], %s103
      %s106 = sshll.u32 [#allocation4], 4
      %s107 = int_to_ptr.vmem [resolvable:$true] %s106
      %109 = dma.vmem_to_hbm [thread:$0]  %s107, 16, %s2, [#allocation5]
    $region21: #{tpu_custom_call.1} parent=1 // pred_fallthru
      _
    // Predicated region
    $region22: #{tpu_custom_call.1} parent=1 // pred_check
      _
    $region23: #{tpu_custom_call.1} parent=1 // pred_check_branch
      %111 = sbr.rel (0) target = $region25
    $region24: #{tpu_custom_call.1} parent=1 // pred_region
      %112 = dma.done [#allocation5], 16
    $region25: #{tpu_custom_call.1} parent=1 // pred_fallthru
      _
    %113 = vsyncpa [#allocation5], 1

</llo_original>
